<compile_context>
chip_gen: v7x
topology: tpu7x:2x2x1
jax: 0.10.0
libtpu: 0.0.40
codegen_flags: <defaults>
</compile_context>

<pallas_src>
import functools
import numpy as np
import jax
import jax.numpy as jnp
from jax.experimental import pallas as pl
from jax.experimental.pallas import tpu as pltpu

# ----------------------------------------------------------------------------
# Small demo sizes consistent with the module (batch chosen so B*N = 128 rows).
# ----------------------------------------------------------------------------
B = 32         # batch
N = 4          # node_num
C = 4          # hidden_channels
HID = N * C * 2   # hz width = node_num * hidden_channels * 2 = 32


# ----------------------------------------------------------------------------
# Pallas kernel: rows are (batch * node); all contractions besides the two
# weight matmuls run on the VPU.
# ----------------------------------------------------------------------------
def _f_func_hz_cde_kernel(
    h_ref,      # (rb, C)    bf16   h[b,n,:]
    z_ref,      # (rb, C)    bf16   z[b,n,:]
    grad_ref,   # (rb, 2)    f32    dX/dt at the query time
    wf_ref,     # (C, 2C)    bf16   func_f weights, lane layout col = j*C + i
    bf_ref,     # (1, 2C)    f32
    wg_ref,     # (C, C*C)   bf16   func_g weights, lane layout col = k*C + i
    bg_ref,     # (1, C*C)   f32
    out_ref,    # (rb, 2C)   f32    [:, :C] = dh,  [:, C:] = out
):
  c = h_ref.shape[1]
  dot = functools.partial(jnp.dot, preferred_element_type=jnp.float32)

  # func_f(h) / func_g(z): linear + tanh (MXU matmul, f32 accumulate, EUP tanh).
  f = jnp.tanh(dot(h_ref[...], wf_ref[...]) + bf_ref[...])   # (rb, 2C)  f[b,n,j,i]
  g = jnp.tanh(dot(z_ref[...], wg_ref[...]) + bg_ref[...])   # (rb, C*C) g[b,n,k,i]

  grad = grad_ref[...]                                        # (rb, 2)

  # dh[b,n,i] = sum_j f[b,n,i,j] * grad[b,n,j]   (2-term FMA on the VPU)
  dh = f[:, :c] * grad[:, 0:1] + f[:, c:] * grad[:, 1:2]      # (rb, C)

  # out[b,n,i] = sum_k g[b,n,i,k] * dh[b,n,k]    ( == ((g @ f) @ grad), reassociated )
  out = g[:, 0:c] * dh[:, 0:1]
  for k in range(1, c):                                        # static unroll (C small)
    out = out + g[:, k * c:(k + 1) * c] * dh[:, k:k + 1]

  out_ref[:, :c] = dh
  out_ref[:, c:] = out


# ----------------------------------------------------------------------------
# Parameters (deterministic) and one-time host-side constant preparation.
# ----------------------------------------------------------------------------
def make_params(key):
  ks = jax.random.split(key, 4)
  p = {}
  p["Wf"] = jax.random.normal(ks[0], (C, 2 * C), jnp.float32) * 0.2   # func_f linear
  p["bf"] = jax.random.normal(ks[1], (2 * C,), jnp.float32) * 0.2
  p["Wg"] = jax.random.normal(ks[2], (C, C * C), jnp.float32) * 0.2   # func_g linear
  p["bg"] = jax.random.normal(ks[3], (C * C,), jnp.float32) * 0.2
  return p


def prepare_kernel_constants(params):
  """Build the (lane-permuted, bf16) kernel constants ONCE per parameter set.

  Reference lane layouts:  f col = i*2 + j,  g col = i*C + k.
  Kernel lane layouts:     f col = j*C + i,  g col = k*C + i   (summed index is
  the major lane block, so the contractions are static slices in the kernel).
  """
  Wf = np.asarray(params["Wf"], np.float32)
  bf = np.asarray(params["bf"], np.float32)
  Wg = np.asarray(params["Wg"], np.float32)
  bg = np.asarray(params["bg"], np.float32)

  perm_f = np.array([i * 2 + j for j in range(2) for i in range(C)])
  perm_g = np.array([i * C + k for k in range(C) for i in range(C)])

  wf_k = jnp.asarray(Wf[:, perm_f], jnp.bfloat16)          # (C, 2C)
  bf_k = jnp.asarray(bf[perm_f][None, :], jnp.float32)     # (1, 2C)
  wg_k = jnp.asarray(Wg[:, perm_g], jnp.bfloat16)          # (C, C*C)
  bg_k = jnp.asarray(bg[perm_g][None, :], jnp.float32)     # (1, C*C)
  return wf_k, bf_k, wg_k, bg_k


# ----------------------------------------------------------------------------
# Jitted wrapper: layout plumbing in XLA, vector field in Pallas.
# ----------------------------------------------------------------------------
@functools.partial(jax.jit, static_argnames=("node_num", "hidden_channels", "row_block"))
def f_func_hz_cde_pallas(hz, control_grad, wf_k, bf_k, wg_k, bg_k, *,
                         node_num, hidden_channels, row_block=None):
  bsz = hz.shape[0]
  n, c = node_num, hidden_channels
  bn = bsz * n

  # De-interleave h / z (PyTorch hz layout: (b, n, c, [h|z])) and flatten nodes
  # into the matmul row axis.  MXU operands are cast to bf16.
  hz4 = hz.reshape(bsz, n, c, 2)
  h = hz4[..., 0].reshape(bn, c).astype(jnp.bfloat16)
  z = hz4[..., 1].reshape(bn, c).astype(jnp.bfloat16)
  grad = control_grad.reshape(bn, 2).astype(jnp.float32)

  rb = bn if row_block is None else row_block
  assert bn % rb == 0 and rb % 8 == 0, "row_block must divide B*N and be a multiple of 8"
  grid = (bn // rb,)

  row_spec = lambda i: (i, 0)      # row-tiled operands
  const_spec = lambda i: (0, 0)    # weights/biases stay resident across grid steps

  out = pl.pallas_call(
      _f_func_hz_cde_kernel,
      out_shape=jax.ShapeDtypeStruct((bn, 2 * c), jnp.float32),
      grid_spec=pltpu.PrefetchScalarGridSpec(
          num_scalar_prefetch=0,
          grid=grid,
          in_specs=[
              pl.BlockSpec((rb, c), row_spec),
              pl.BlockSpec((rb, c), row_spec),
              pl.BlockSpec((rb, 2), row_spec),
              pl.BlockSpec((c, 2 * c), const_spec),
              pl.BlockSpec((1, 2 * c), const_spec),
              pl.BlockSpec((c, c * c), const_spec),
              pl.BlockSpec((1, c * c), const_spec),
          ],
          out_specs=pl.BlockSpec((rb, 2 * c), row_spec),
      ),
      compiler_params=pltpu.CompilerParams(
          dimension_semantics=("parallel",)),
  )(h, z, grad, wf_k, bf_k, wg_k, bg_k)

  # (b*n, [dh(C) | out(C)]) -> (b, n, c, 2) interleave -> (b, n*c*2).
  return out.reshape(bsz, n, 2, c).transpose(0, 1, 3, 2).reshape(bsz, n * c * 2)


# ----------------------------------------------------------------------------
# Pure-JAX reference mirroring the PyTorch forward exactly (f32).
# ----------------------------------------------------------------------------
def reference_forward(params, control_grad, hz):
  Wf, bf, Wg, bg = params["Wf"], params["bf"], params["Wg"], params["bg"]
  bsz = hz.shape[0]
  hz4 = hz.reshape(bsz, N, C, 2)
  h, z = hz4[..., 0], hz4[..., 1]
  f = jnp.tanh(h @ Wf + bf).reshape(bsz, N, C, 2)          # func_f(h)
  g = jnp.tanh(z @ Wg + bg).reshape(bsz, N, C, C)          # func_g(z)
  fg = jnp.einsum("bnik,bnkj->bnij", g, f)                 # torch.matmul(g, f)
  dh = jnp.einsum("bnij,bnj->bni", f, control_grad)        # f  @ grad
  out = jnp.einsum("bnij,bnj->bni", fg, control_grad)      # fg @ grad
  return jnp.stack([dh, out], axis=-1).reshape(bsz, N * C * 2)


if __name__ == "__main__":
  key = jax.random.PRNGKey(0)
  kp, kg, kh = jax.random.split(key, 3)
  params = make_params(kp)

  # Built once per parameter set; stays resident on device across solver steps.
  consts = prepare_kernel_constants(params)

  # dX_dt(t) evaluated at the query time: (B, N, 2) control gradient.
  control_grad = jax.random.normal(kg, (B, N, 2), jnp.float32)
  hz0 = jax.random.normal(kh, (B, HID), jnp.float32) * 0.5

  out = f_func_hz_cde_pallas(hz0, control_grad, *consts,
                             node_num=N, hidden_channels=C, row_block=64)
  out = jax.block_until_ready(out)
  ref = jax.block_until_ready(reference_forward(params, control_grad, hz0))

  assert out.shape == (B, HID)
  if not np.allclose(np.asarray(out), np.asarray(ref), rtol=2e-2, atol=2e-2):
    raise AssertionError("Pallas kernel output does not match reference")
  print("KERNEL_OK")
</pallas_src>

<mosaic_0001>
module attributes {stable_mosaic.version = 11 : i64} {
  func.func @_f_func_hz_cde_kernel(%arg0: i32, %arg1: memref<64x4xbf16, #tpu.memory_space<vmem>>, %arg2: memref<64x4xbf16, #tpu.memory_space<vmem>>, %arg3: memref<64x2xf32, #tpu.memory_space<vmem>>, %arg4: memref<4x8xbf16, #tpu.memory_space<vmem>>, %arg5: memref<1x8xf32, #tpu.memory_space<vmem>>, %arg6: memref<4x16xbf16, #tpu.memory_space<vmem>>, %arg7: memref<1x16xf32, #tpu.memory_space<vmem>>, %arg8: memref<64x8xf32, #tpu.memory_space<vmem>>) attributes {dimension_semantics = [#tpu.dimension_semantics<parallel>], iteration_bounds = array<i64: 2>, scalar_prefetch = 0 : i64, scratch_operands = 0 : i64, tpu.core_type = #tpu.core_type<tc>, window_params = [{transform_indices = @transform_0, window_bounds = array<i64: 64, 4>}, {transform_indices = @transform_1, window_bounds = array<i64: 64, 4>}, {transform_indices = @transform_2, window_bounds = array<i64: 64, 2>}, {pipeline_mode = #tpu.pipeline_mode<synchronous>, transform_indices = @transform_3, window_bounds = array<i64: 4, 8>}, {pipeline_mode = #tpu.pipeline_mode<synchronous>, transform_indices = @transform_4, window_bounds = array<i64: 1, 8>}, {pipeline_mode = #tpu.pipeline_mode<synchronous>, transform_indices = @transform_5, window_bounds = array<i64: 4, 16>}, {pipeline_mode = #tpu.pipeline_mode<synchronous>, transform_indices = @transform_6, window_bounds = array<i64: 1, 16>}, {transform_indices = @transform_7, window_bounds = array<i64: 64, 8>}]} {
    %c0 = arith.constant 0 : index
    %c0_0 = arith.constant 0 : index
    %0 = vector.load %arg1[%c0, %c0_0] : memref<64x4xbf16, #tpu.memory_space<vmem>>, vector<64x4xbf16>
    %c0_1 = arith.constant 0 : index
    %c0_2 = arith.constant 0 : index
    %1 = vector.load %arg4[%c0_1, %c0_2] : memref<4x8xbf16, #tpu.memory_space<vmem>>, vector<4x8xbf16>
    %cst = arith.constant dense<0.000000e+00> : vector<64x8xf32>
    %2 = tpu.matmul %0, %1, %cst {dimension_numbers = #tpu.dot_dimension_numbers<[1], [0], [0], [1], [0, 0, 1, 1], [], []>} : vector<64x4xbf16>, vector<4x8xbf16>, vector<64x8xf32> -> vector<64x8xf32>
    %c0_3 = arith.constant 0 : index
    %c0_4 = arith.constant 0 : index
    %3 = vector.load %arg5[%c0_3, %c0_4] : memref<1x8xf32, #tpu.memory_space<vmem>>, vector<1x8xf32>
    %4 = vector.broadcast %3 : vector<1x8xf32> to vector<64x8xf32>
    %5 = arith.addf %2, %4 : vector<64x8xf32>
    %6 = math.tanh %5 : vector<64x8xf32>
    %c0_5 = arith.constant 0 : index
    %c0_6 = arith.constant 0 : index
    %7 = vector.load %arg2[%c0_5, %c0_6] : memref<64x4xbf16, #tpu.memory_space<vmem>>, vector<64x4xbf16>
    %c0_7 = arith.constant 0 : index
    %c0_8 = arith.constant 0 : index
    %8 = vector.load %arg6[%c0_7, %c0_8] : memref<4x16xbf16, #tpu.memory_space<vmem>>, vector<4x16xbf16>
    %cst_9 = arith.constant dense<0.000000e+00> : vector<64x16xf32>
    %9 = tpu.matmul %7, %8, %cst_9 {dimension_numbers = #tpu.dot_dimension_numbers<[1], [0], [0], [1], [0, 0, 1, 1], [], []>} : vector<64x4xbf16>, vector<4x16xbf16>, vector<64x16xf32> -> vector<64x16xf32>
    %c0_10 = arith.constant 0 : index
    %c0_11 = arith.constant 0 : index
    %10 = vector.load %arg7[%c0_10, %c0_11] : memref<1x16xf32, #tpu.memory_space<vmem>>, vector<1x16xf32>
    %11 = vector.broadcast %10 : vector<1x16xf32> to vector<64x16xf32>
    %12 = arith.addf %9, %11 : vector<64x16xf32>
    %13 = math.tanh %12 : vector<64x16xf32>
    %c0_12 = arith.constant 0 : index
    %c0_13 = arith.constant 0 : index
    %14 = vector.load %arg3[%c0_12, %c0_13] : memref<64x2xf32, #tpu.memory_space<vmem>>, vector<64x2xf32>
    %15 = vector.extract_strided_slice %6 {offsets = [0, 0], sizes = [64, 4], strides = [1, 1]} : vector<64x8xf32> to vector<64x4xf32>
    %16 = vector.extract_strided_slice %14 {offsets = [0, 0], sizes = [64, 1], strides = [1, 1]} : vector<64x2xf32> to vector<64x1xf32>
    %17 = vector.broadcast %16 : vector<64x1xf32> to vector<64x4xf32>
    %18 = arith.mulf %15, %17 : vector<64x4xf32>
    %19 = vector.extract_strided_slice %6 {offsets = [0, 4], sizes = [64, 4], strides = [1, 1]} : vector<64x8xf32> to vector<64x4xf32>
    %20 = vector.extract_strided_slice %14 {offsets = [0, 1], sizes = [64, 1], strides = [1, 1]} : vector<64x2xf32> to vector<64x1xf32>
    %21 = vector.broadcast %20 : vector<64x1xf32> to vector<64x4xf32>
    %22 = arith.mulf %19, %21 : vector<64x4xf32>
    %23 = arith.addf %18, %22 : vector<64x4xf32>
    %24 = vector.extract_strided_slice %13 {offsets = [0, 0], sizes = [64, 4], strides = [1, 1]} : vector<64x16xf32> to vector<64x4xf32>
    %25 = vector.extract_strided_slice %23 {offsets = [0, 0], sizes = [64, 1], strides = [1, 1]} : vector<64x4xf32> to vector<64x1xf32>
    %26 = vector.broadcast %25 : vector<64x1xf32> to vector<64x4xf32>
    %27 = arith.mulf %24, %26 : vector<64x4xf32>
    %28 = vector.extract_strided_slice %13 {offsets = [0, 4], sizes = [64, 4], strides = [1, 1]} : vector<64x16xf32> to vector<64x4xf32>
    %29 = vector.extract_strided_slice %23 {offsets = [0, 1], sizes = [64, 1], strides = [1, 1]} : vector<64x4xf32> to vector<64x1xf32>
    %30 = vector.broadcast %29 : vector<64x1xf32> to vector<64x4xf32>
    %31 = arith.mulf %28, %30 : vector<64x4xf32>
    %32 = arith.addf %27, %31 : vector<64x4xf32>
    %33 = vector.extract_strided_slice %13 {offsets = [0, 8], sizes = [64, 4], strides = [1, 1]} : vector<64x16xf32> to vector<64x4xf32>
    %34 = vector.extract_strided_slice %23 {offsets = [0, 2], sizes = [64, 1], strides = [1, 1]} : vector<64x4xf32> to vector<64x1xf32>
    %35 = vector.broadcast %34 : vector<64x1xf32> to vector<64x4xf32>
    %36 = arith.mulf %33, %35 : vector<64x4xf32>
    %37 = arith.addf %32, %36 : vector<64x4xf32>
    %38 = vector.extract_strided_slice %13 {offsets = [0, 12], sizes = [64, 4], strides = [1, 1]} : vector<64x16xf32> to vector<64x4xf32>
    %39 = vector.extract_strided_slice %23 {offsets = [0, 3], sizes = [64, 1], strides = [1, 1]} : vector<64x4xf32> to vector<64x1xf32>
    %40 = vector.broadcast %39 : vector<64x1xf32> to vector<64x4xf32>
    %41 = arith.mulf %38, %40 : vector<64x4xf32>
    %42 = arith.addf %37, %41 : vector<64x4xf32>
    %c0_14 = arith.constant 0 : index
    %c0_15 = arith.constant 0 : index
    %43 = vector.load %arg8[%c0_14, %c0_15] : memref<64x8xf32, #tpu.memory_space<vmem>>, vector<64x4xf32>
    tpu.vector_store %arg8[%c0_14, %c0_15], %23 {strides = array<i32>} : memref<64x8xf32, #tpu.memory_space<vmem>>, vector<64x4xf32>,
    %c0_16 = arith.constant 0 : index
    %c4 = arith.constant 4 : index
    %44 = vector.load %arg8[%c0_16, %c4] : memref<64x8xf32, #tpu.memory_space<vmem>>, vector<64x4xf32>
    tpu.vector_store %arg8[%c0_16, %c4], %42 {strides = array<i32>} : memref<64x8xf32, #tpu.memory_space<vmem>>, vector<64x4xf32>,
    return
  }
  func.func @transform_0(%arg0: i32) -> (i32, i32) {
    %c0_i32 = arith.constant 0 : i32
    %c0_i32_0 = arith.constant 0 : i32
    return %arg0, %c0_i32 : i32, i32
  }
  func.func @transform_1(%arg0: i32) -> (i32, i32) {
    %c0_i32 = arith.constant 0 : i32
    %c0_i32_0 = arith.constant 0 : i32
    return %arg0, %c0_i32 : i32, i32
  }
  func.func @transform_2(%arg0: i32) -> (i32, i32) {
    %c0_i32 = arith.constant 0 : i32
    %c0_i32_0 = arith.constant 0 : i32
    return %arg0, %c0_i32 : i32, i32
  }
  func.func @transform_3(%arg0: i32) -> (i32, i32) {
    %c0_i32 = arith.constant 0 : i32
    %c0_i32_0 = arith.constant 0 : i32
    %c0_i32_1 = arith.constant 0 : i32
    return %c0_i32, %c0_i32_0 : i32, i32
  }
  func.func @transform_4(%arg0: i32) -> (i32, i32) {
    %c0_i32 = arith.constant 0 : i32
    %c0_i32_0 = arith.constant 0 : i32
    %c0_i32_1 = arith.constant 0 : i32
    return %c0_i32, %c0_i32_0 : i32, i32
  }
  func.func @transform_5(%arg0: i32) -> (i32, i32) {
    %c0_i32 = arith.constant 0 : i32
    %c0_i32_0 = arith.constant 0 : i32
    %c0_i32_1 = arith.constant 0 : i32
    return %c0_i32, %c0_i32_0 : i32, i32
  }
  func.func @transform_6(%arg0: i32) -> (i32, i32) {
    %c0_i32 = arith.constant 0 : i32
    %c0_i32_0 = arith.constant 0 : i32
    %c0_i32_1 = arith.constant 0 : i32
    return %c0_i32, %c0_i32_0 : i32, i32
  }
  func.func @transform_7(%arg0: i32) -> (i32, i32) {
    %c0_i32 = arith.constant 0 : i32
    %c0_i32_0 = arith.constant 0 : i32
    return %arg0, %c0_i32 : i32, i32
  }
}

</mosaic_0001>

<llo_original>
// kernel: f_func_hz_cde_pallas.1
$region0: #{f_func_hz_cde_pallas.1}
  #allocation0 [shape = 'u32[]', space=smem, size = 0x4, offset = 0x4, fixed_abs, tag = 'smem constant byte address 0x4 - core index']
  #allocation1 [shape = 'u32[144,128]{1,0:T(1,128)}', space=vmem, size = 0x12000, scoped, tag = 'internal scratch']
  %s0 = inlined_call_operand.vmem [shape: bf16[128,4], index: 0, kind: input, shape index: {}]
  %s1 = inlined_call_operand.vmem [shape: bf16[128,4], index: 1, kind: input, shape index: {}]
  %s2 = inlined_call_operand.vmem [shape: f32[128,2], index: 2, kind: input, shape index: {}]
  %s3 = inlined_call_operand.vmem [shape: bf16[4,8], index: 3, kind: input, shape index: {}]
  %s4 = inlined_call_operand.vmem [shape: f32[1,8], index: 4, kind: input, shape index: {}]
  %s5 = inlined_call_operand.vmem [shape: bf16[4,16], index: 5, kind: input, shape index: {}]
  %s6 = inlined_call_operand.vmem [shape: f32[1,16], index: 6, kind: input, shape index: {}]
  %s7 = inlined_call_operand.vmem [shape: f32[128,8], index: 7, kind: output, shape index: {}]
  %s8 = sld [smem:[#allocation0]]
  $region61: #{f_func_hz_cde_pallas.1} parent=0
    _
  %s10 = ssub.s32 1, %s8
  %s11 = scalar_select 0, %s10, %s8
  loop: start=0, step=1, limit=4
  $region2: #{f_func_hz_cde_pallas.1} parent=0 // loop_pre_header
    _
  $region3: #{f_func_hz_cde_pallas.1} parent=0 // loop_header
    %s13 = sphi 0, %s17
    %p14 = scmp.ge.s32.totalorder %s13, 4
    %s23 = sphi 0, %s25
    %s26 = sphi 0, %s23
    %s27 = sphi 0, %s26
    %s43 = sphi 0, %s27
    %s49 = sphi 0, %s51
    %s52 = sphi 0, %s49
    %s53 = sphi 0, %s52
    %s69 = sphi 0, %s53
    %s75 = sphi 0, %s77
    %s78 = sphi 0, %s75
    %s79 = sphi 0, %s78
    %s95 = sphi 0, %s79
    %s99 = sphi 0, %s99
    %s101 = sphi 0, %s99
    %s102 = sphi 0, %s101
    %s116 = sphi 0, %s102
    %s120 = sphi 0, %s120
    %s122 = sphi 0, %s120
    %s123 = sphi 0, %s122
    %s137 = sphi 0, %s123
    %s141 = sphi 0, %s141
    %s143 = sphi 0, %s141
    %s144 = sphi 0, %s143
    %s158 = sphi 0, %s144
    %s162 = sphi 0, %s162
    %s164 = sphi 0, %s162
    %s165 = sphi 0, %s164
    %s179 = sphi 0, %s165
    %s185 = sphi 0, %s187
    %s188 = sphi 0, %s185
    %s189 = sphi 0, %s188
    %s205 = sphi 0, %s189
  $region4: #{f_func_hz_cde_pallas.1} parent=0 // loop_header_branch
    %16 = sbr.rel (%p14) target = $region8
  $region5: #{f_func_hz_cde_pallas.1} parent=0 // loop_body
    %s18 = ssub.s32 %s13, 1
    %s19 = ssub.s32 %s13, 2
    %s20 = sadd.s32 %s13, 1
    %s21 = ssub.s32 %s13, %s20
    %p22 = scmp.eq.s32.totalorder %s21, 0
    %s24 = sadd.s32 %s23, 1
    %s25 = scalar_select %p22, %s23, %s24
    %p28 = pneg %p22
    %p29 = scmp.eq.s32.totalorder %s13, 1
    %p30 = por %p28, %p29
    %p31 = scmp.ne.s32.totalorder %s23, %s26
    %p32 = scmp.eq.s32.totalorder %s13, 0
    %p33 = por %p31, %p32
    %p34 = scmp.ne.s32.totalorder %s23, %s26
    %p35 = scmp.eq.s32.totalorder %s18, 1
    %p36 = por %p34, %p35
    %p37 = scmp.ne.s32.totalorder %s26, %s27
    %p38 = scmp.eq.s32.totalorder %s18, 0
    %p39 = por %p37, %p38
    %p40 = scmp.ne.s32.totalorder %s26, %s27
    %p41 = scmp.eq.s32.totalorder %s19, 1
    %p42 = por %p40, %p41
    %p44 = scmp.ne.s32.totalorder %s27, %s43
    %p45 = scmp.eq.s32.totalorder %s19, 0
    %p46 = por %p44, %p45
    %s47 = ssub.s32 %s13, %s20
    %p48 = scmp.eq.s32.totalorder %s47, 0
    %s50 = sadd.s32 %s49, 1
    %s51 = scalar_select %p48, %s49, %s50
    %p54 = pneg %p48
    %p55 = scmp.eq.s32.totalorder %s13, 1
    %p56 = por %p54, %p55
    %p57 = scmp.ne.s32.totalorder %s49, %s52
    %p58 = scmp.eq.s32.totalorder %s13, 0
    %p59 = por %p57, %p58
    %p60 = scmp.ne.s32.totalorder %s49, %s52
    %p61 = scmp.eq.s32.totalorder %s18, 1
    %p62 = por %p60, %p61
    %p63 = scmp.ne.s32.totalorder %s52, %s53
    %p64 = scmp.eq.s32.totalorder %s18, 0
    %p65 = por %p63, %p64
    %p66 = scmp.ne.s32.totalorder %s52, %s53
    %p67 = scmp.eq.s32.totalorder %s19, 1
    %p68 = por %p66, %p67
    %p70 = scmp.ne.s32.totalorder %s53, %s69
    %p71 = scmp.eq.s32.totalorder %s19, 0
    %p72 = por %p70, %p71
    %s73 = ssub.s32 %s13, %s20
    %p74 = scmp.eq.s32.totalorder %s73, 0
    %s76 = sadd.s32 %s75, 1
    %s77 = scalar_select %p74, %s75, %s76
    %p80 = pneg %p74
    %p81 = scmp.eq.s32.totalorder %s13, 1
    %p82 = por %p80, %p81
    %p83 = scmp.ne.s32.totalorder %s75, %s78
    %p84 = scmp.eq.s32.totalorder %s13, 0
    %p85 = por %p83, %p84
    %p86 = scmp.ne.s32.totalorder %s75, %s78
    %p87 = scmp.eq.s32.totalorder %s18, 1
    %p88 = por %p86, %p87
    %p89 = scmp.ne.s32.totalorder %s78, %s79
    %p90 = scmp.eq.s32.totalorder %s18, 0
    %p91 = por %p89, %p90
    %p92 = scmp.ne.s32.totalorder %s78, %s79
    %p93 = scmp.eq.s32.totalorder %s19, 1
    %p94 = por %p92, %p93
    %p96 = scmp.ne.s32.totalorder %s79, %s95
    %p97 = scmp.eq.s32.totalorder %s19, 0
    %p98 = por %p96, %p97
    %s100 = sadd.s32 %s99, 1
    %p103 = scmp.eq.s32.totalorder %s13, 1
    %p104 = scmp.ne.s32.totalorder %s99, %s101
    %p105 = scmp.eq.s32.totalorder %s13, 0
    %p106 = por %p104, %p105
    %p107 = scmp.ne.s32.totalorder %s99, %s101
    %p108 = scmp.eq.s32.totalorder %s18, 1
    %p109 = por %p107, %p108
    %p110 = scmp.ne.s32.totalorder %s101, %s102
    %p111 = scmp.eq.s32.totalorder %s18, 0
    %p112 = por %p110, %p111
    %p113 = scmp.ne.s32.totalorder %s101, %s102
    %p114 = scmp.eq.s32.totalorder %s19, 1
    %p115 = por %p113, %p114
    %p117 = scmp.ne.s32.totalorder %s102, %s116
    %p118 = scmp.eq.s32.totalorder %s19, 0
    %p119 = por %p117, %p118
    %s121 = sadd.s32 %s120, 1
    %p124 = scmp.eq.s32.totalorder %s13, 1
    %p125 = scmp.ne.s32.totalorder %s120, %s122
    %p126 = scmp.eq.s32.totalorder %s13, 0
    %p127 = por %p125, %p126
    %p128 = scmp.ne.s32.totalorder %s120, %s122
    %p129 = scmp.eq.s32.totalorder %s18, 1
    %p130 = por %p128, %p129
    %p131 = scmp.ne.s32.totalorder %s122, %s123
    %p132 = scmp.eq.s32.totalorder %s18, 0
    %p133 = por %p131, %p132
    %p134 = scmp.ne.s32.totalorder %s122, %s123
    %p135 = scmp.eq.s32.totalorder %s19, 1
    %p136 = por %p134, %p135
    %p138 = scmp.ne.s32.totalorder %s123, %s137
    %p139 = scmp.eq.s32.totalorder %s19, 0
    %p140 = por %p138, %p139
    %s142 = sadd.s32 %s141, 1
    %p145 = scmp.eq.s32.totalorder %s13, 1
    %p146 = scmp.ne.s32.totalorder %s141, %s143
    %p147 = scmp.eq.s32.totalorder %s13, 0
    %p148 = por %p146, %p147
    %p149 = scmp.ne.s32.totalorder %s141, %s143
    %p150 = scmp.eq.s32.totalorder %s18, 1
    %p151 = por %p149, %p150
    %p152 = scmp.ne.s32.totalorder %s143, %s144
    %p153 = scmp.eq.s32.totalorder %s18, 0
    %p154 = por %p152, %p153
    %p155 = scmp.ne.s32.totalorder %s143, %s144
    %p156 = scmp.eq.s32.totalorder %s19, 1
    %p157 = por %p155, %p156
    %p159 = scmp.ne.s32.totalorder %s144, %s158
    %p160 = scmp.eq.s32.totalorder %s19, 0
    %p161 = por %p159, %p160
    %s163 = sadd.s32 %s162, 1
    %p166 = scmp.eq.s32.totalorder %s13, 1
    %p167 = scmp.ne.s32.totalorder %s162, %s164
    %p168 = scmp.eq.s32.totalorder %s13, 0
    %p169 = por %p167, %p168
    %p170 = scmp.ne.s32.totalorder %s162, %s164
    %p171 = scmp.eq.s32.totalorder %s18, 1
    %p172 = por %p170, %p171
    %p173 = scmp.ne.s32.totalorder %s164, %s165
    %p174 = scmp.eq.s32.totalorder %s18, 0
    %p175 = por %p173, %p174
    %p176 = scmp.ne.s32.totalorder %s164, %s165
    %p177 = scmp.eq.s32.totalorder %s19, 1
    %p178 = por %p176, %p177
    %p180 = scmp.ne.s32.totalorder %s165, %s179
    %p181 = scmp.eq.s32.totalorder %s19, 0
    %p182 = por %p180, %p181
    %s183 = ssub.s32 %s13, %s20
    %p184 = scmp.eq.s32.totalorder %s183, 0
    %s186 = sadd.s32 %s185, 1
    %s187 = scalar_select %p184, %s185, %s186
    %p190 = pneg %p184
    %p191 = scmp.eq.s32.totalorder %s13, 1
    %p192 = por %p190, %p191
    %p193 = scmp.ne.s32.totalorder %s185, %s188
    %p194 = scmp.eq.s32.totalorder %s13, 0
    %p195 = por %p193, %p194
    %p196 = scmp.ne.s32.totalorder %s185, %s188
    %p197 = scmp.eq.s32.totalorder %s18, 1
    %p198 = por %p196, %p197
    %p199 = scmp.ne.s32.totalorder %s188, %s189
    %p200 = scmp.eq.s32.totalorder %s18, 0
    %p201 = por %p199, %p200
    %p202 = scmp.ne.s32.totalorder %s188, %s189
    %p203 = scmp.eq.s32.totalorder %s19, 1
    %p204 = por %p202, %p203
    %p206 = scmp.ne.s32.totalorder %s189, %s205
    %p207 = scmp.eq.s32.totalorder %s19, 0
    %p208 = por %p206, %p207
    %p209 = scmp.le.s32.totalorder 1, %s13
    %p210 = scmp.lt.s32.totalorder %s13, 3
    %p211 = pnand %p209, %p210
    %p212 = pneg %p211
    // Predicated region
    $region9: #{f_func_hz_cde_pallas.1} parent=5 // pred_check
      _
    $region10: #{f_func_hz_cde_pallas.1} parent=5 // pred_check_branch
      %214 = sbr.rel (%p211) target = $region12
    $region11: #{f_func_hz_cde_pallas.1} parent=5 // pred_region
      %s215 = ssub.s32 %s13, 1
      // Predicated region
      $region13: #{f_func_hz_cde_pallas.1} parent=11 // pred_check
        %p216 = pneg %p112
      $region14: #{f_func_hz_cde_pallas.1} parent=11 // pred_check_branch
        %218 = sbr.rel (%p216) target = $region16
      $region15: #{f_func_hz_cde_pallas.1} parent=11 // pred_region
        _
      $region16: #{f_func_hz_cde_pallas.1} parent=11 // pred_fallthru
        _
      // Predicated region
      $region17: #{f_func_hz_cde_pallas.1} parent=11 // pred_check
        %p219 = pneg %p133
      $region18: #{f_func_hz_cde_pallas.1} parent=11 // pred_check_branch
        %221 = sbr.rel (%p219) target = $region20
      $region19: #{f_func_hz_cde_pallas.1} parent=11 // pred_region
        _
      $region20: #{f_func_hz_cde_pallas.1} parent=11 // pred_fallthru
        _
      // Predicated region
      $region21: #{f_func_hz_cde_pallas.1} parent=11 // pred_check
        %p222 = pneg %p154
      $region22: #{f_func_hz_cde_pallas.1} parent=11 // pred_check_branch
        %224 = sbr.rel (%p222) target = $region24
      $region23: #{f_func_hz_cde_pallas.1} parent=11 // pred_region
        _
      $region24: #{f_func_hz_cde_pallas.1} parent=11 // pred_fallthru
        _
      // Predicated region
      $region25: #{f_func_hz_cde_pallas.1} parent=11 // pred_check
        %p225 = pneg %p175
      $region26: #{f_func_hz_cde_pallas.1} parent=11 // pred_check_branch
        %227 = sbr.rel (%p225) target = $region28
      $region27: #{f_func_hz_cde_pallas.1} parent=11 // pred_region
        _
      $region28: #{f_func_hz_cde_pallas.1} parent=11 // pred_fallthru
        _
    $region12: #{f_func_hz_cde_pallas.1} parent=5 // pred_fallthru
      _
    %p228 = scmp.lt.s32.totalorder %s13, 2
    // Predicated region
    $region29: #{f_func_hz_cde_pallas.1} parent=5 // pred_check
      %p229 = pneg %p228
    $region30: #{f_func_hz_cde_pallas.1} parent=5 // pred_check_branch
      %231 = sbr.rel (%p229) target = $region32
    $region31: #{f_func_hz_cde_pallas.1} parent=5 // pred_region
      // Predicated region
      $region33: #{f_func_hz_cde_pallas.1} parent=31 // pred_check
        %p232 = pneg %p33
      $region34: #{f_func_hz_cde_pallas.1} parent=31 // pred_check_branch
        %234 = sbr.rel (%p232) target = $region36
      $region35: #{f_func_hz_cde_pallas.1} parent=31 // pred_region
        %s235 = smul.u32 8, %s13
        %p236 = scmp.lt.s32.totalorder %s235, 15
        %s237 = scalar_select %p236, %s235, 15
        %s238 = smul.addr %s237, 4
        %s239 = scalar_lea.vmem %s0, %s238
        %s240 = smul.u32 8, %s13
      $region36: #{f_func_hz_cde_pallas.1} parent=31 // pred_fallthru
        _
      // Predicated region
      $region37: #{f_func_hz_cde_pallas.1} parent=31 // pred_check
        %p241 = pneg %p59
      $region38: #{f_func_hz_cde_pallas.1} parent=31 // pred_check_branch
        %243 = sbr.rel (%p241) target = $region40
      $region39: #{f_func_hz_cde_pallas.1} parent=31 // pred_region
        %s244 = smul.u32 8, %s13
        %p245 = scmp.lt.s32.totalorder %s244, 15
        %s246 = scalar_select %p245, %s244, 15
        %s247 = smul.addr %s246, 4
        %s248 = scalar_lea.vmem %s1, %s247
        %s249 = smul.u32 8, %s13
      $region40: #{f_func_hz_cde_pallas.1} parent=31 // pred_fallthru
        _
      // Predicated region
      $region41: #{f_func_hz_cde_pallas.1} parent=31 // pred_check
        %p250 = pneg %p85
      $region42: #{f_func_hz_cde_pallas.1} parent=31 // pred_check_branch
        %252 = sbr.rel (%p250) target = $region44
      $region43: #{f_func_hz_cde_pallas.1} parent=31 // pred_region
        %s253 = smul.u32 8, %s13
        %p254 = scmp.lt.s32.totalorder %s253, 15
        %s255 = scalar_select %p254, %s253, 15
        %s256 = smul.addr %s255, 8
        %s257 = scalar_lea.vmem %s2, %s256
        %s258 = smul.u32 8, %s13
      $region44: #{f_func_hz_cde_pallas.1} parent=31 // pred_fallthru
        _
    $region32: #{f_func_hz_cde_pallas.1} parent=5 // pred_fallthru
      _
    %p259 = scmp.le.s32.totalorder 1, %s13
    %p260 = scmp.lt.s32.totalorder %s13, 3
    %p261 = pnand %p259, %p260
    %p262 = pneg %p261
    // Predicated region
    $region45: #{f_func_hz_cde_pallas.1} parent=5 // pred_check
      _
    $region46: #{f_func_hz_cde_pallas.1} parent=5 // pred_check_branch
      %264 = sbr.rel (%p261) target = $region48
    $region47: #{f_func_hz_cde_pallas.1} parent=5 // pred_region
      %s265 = ssub.s32 %s13, 1
      %s266 = smul.u32 8, %s18
      %p267 = scmp.lt.s32.totalorder %s266, 15
      %s268 = scalar_select %p267, %s266, 15
      %s269 = smul.addr %s268, 4
      %s270 = scalar_lea.vmem %s0, %s269
      %p271 = pneg %p39
      %p272 = pneg %p36
      %s273 = smul.u32 8, %s18
      %p274 = scmp.lt.s32.totalorder %s273, 15
      %s275 = scalar_select %p274, %s273, 15
      %s276 = smul.addr %s275, 4
      %s277 = scalar_lea.vmem %s1, %s276
      %p278 = pneg %p65
      %p279 = pneg %p62
      %s280 = smul.u32 8, %s18
      %p281 = scmp.lt.s32.totalorder %s280, 15
      %s282 = scalar_select %p281, %s280, 15
      %s283 = smul.addr %s282, 8
      %s284 = scalar_lea.vmem %s2, %s283
      %p285 = pneg %p91
      %p286 = pneg %p88
      %p287 = pneg %p112
      %p288 = pneg %p109
      %p289 = pneg %p133
      %p290 = pneg %p130
      %p291 = pneg %p154
      %p292 = pneg %p151
      %p293 = pneg %p175
      %p294 = pneg %p172
      %p295 = pneg %p201
      %p296 = pneg %p198
      %s297 = smul.u32 8, %s18
      %p298 = scmp.lt.s32.totalorder %s297, 15
      %s299 = scalar_select %p298, %s297, 15
      %s300 = smul.addr %s299, 8
      %s301 = scalar_lea.vmem %s7, %s300
      %s302 = smul.u32 8, %s18
      %p303 = scmp.lt.s32.totalorder %s302, 15
      %s304 = scalar_select %p303, %s302, 15
      %s305 = smul.addr %s304, 4
      %s306 = scalar_lea.vmem %s0, %s305
      %s307 = smul.u32 8, %s18
      %s308 = smul.u32 8, %s18
      %p309 = scmp.lt.s32.totalorder %s308, 15
      %s310 = scalar_select %p309, %s308, 15
      %s311 = smul.addr %s310, 4
      %s312 = scalar_lea.vmem %s1, %s311
      %s313 = smul.u32 8, %s18
      %s314 = smul.u32 8, %s18
      %p315 = scmp.lt.s32.totalorder %s314, 15
      %s316 = scalar_select %p315, %s314, 15
      %s317 = smul.addr %s316, 8
      %s318 = scalar_lea.vmem %s2, %s317
      %s319 = smul.u32 8, %s18
      %s320 = smul.u32 8, %s18
      %p321 = scmp.lt.s32.totalorder %s320, 15
      %s322 = scalar_select %p321, %s320, 15
      %s323 = smul.addr %s322, 8
      %s324 = scalar_lea.vmem %s7, %s323
      %s325 = smul.u32 8, %s18
      %v327 = vld [vmem:[%s306] sm:$0xf]
      %v328 = vld [vmem:[%s306 + $0x4] sm:$0xf]
      %v329 = vld [vmem:[%s306 + $0x8] sm:$0xf]
      %v330 = vld [vmem:[%s306 + $0xc] sm:$0xf]
      %v331 = vld [vmem:[%s306 + $0x10] sm:$0xf]
      %v332 = vld [vmem:[%s306 + $0x14] sm:$0xf]
      %v333 = vld [vmem:[%s306 + $0x18] sm:$0xf]
      %v334 = vld [vmem:[%s306 + $0x1c] sm:$0xf]
      %v335 = vld [vmem:[%s3] sm:$0x3]
      %v336 = vld [vmem:[%s4] sm:$0x1]
      %v338 = vlaneseq
      %v339 = vshrl.u32 %v338, 7
      %v340 = vsub.s32 0, %v339
      %v341 = vrot.slane %v336, %v340
      %v351 = vunpack.c.l.b16 %v327
      %v352 = vunpack.c.l.b16 %v328
      %v353 = vunpack.c.l.b16 %v329
      %v354 = vunpack.c.l.b16 %v330
      %v355 = vunpack.c.l.b16 %v331
      %v356 = vunpack.c.l.b16 %v332
      %v357 = vunpack.c.l.b16 %v333
      %v358 = vunpack.c.l.b16 %v334
      %v359 = vpack.c.b16 %v352, %v351
      %v360 = vpack.c.b16 %v354, %v353
      %v361 = vpack.c.b16 %v356, %v355
      %v362 = vpack.c.b16 %v358, %v357
      %vm363 = vcmask 31744
      %v365 = vsel %vm363, %v359, 0
      %v368 = vsel %vm363, %v360, 0
      %v371 = vsel %vm363, %v361, 0
      %v374 = vsel %vm363, %v362, 0
      %vm376 = vcmask 1041408
      %v378 = vsel %vm376, %v335, 0
      %380 = vmatprep.subr.bf16.mxu0 0
      %381 = vmatpush1.bf16.msra.mxu0 %v378
      %382 = vmatprep.subr.bf16.mxu0 0
      %383 = vmatpush1.bf16.msra.mxu0 0
      %384 = vmatprep.subr.bf16.mxu0 0
      %385 = vmatpush1.bf16.msra.mxu0 0
      %386 = vmatprep.subr.bf16.mxu0 0
      %387 = vmatpush1.bf16.msra.mxu0 0
      %388 = vmatprep.subr.bf16.mxu0 0
      %389 = vmatpush1.bf16.msra.mxu0 0
      %390 = vmatprep.subr.bf16.mxu0 0
      %391 = vmatpush1.bf16.msra.mxu0 0
      %392 = vmatprep.subr.bf16.mxu0 0
      %393 = vmatpush1.bf16.msra.mxu0 0
      %394 = vmatprep.subr.bf16.mxu0 0
      %395 = vmatpush1.bf16.msra.mxu0 0
      %396 = vmatprep.subr.bf16.mxu0 0
      %397 = vmatpush1.bf16.msra.mxu0 0
      %398 = vmatprep.subr.bf16.mxu0 0
      %399 = vmatpush1.bf16.msra.mxu0 0
      %400 = vmatprep.subr.bf16.mxu0 0
      %401 = vmatpush1.bf16.msra.mxu0 0
      %402 = vmatprep.subr.bf16.mxu0 0
      %403 = vmatpush1.bf16.msra.mxu0 0
      %404 = vmatprep.subr.bf16.mxu0 0
      %405 = vmatpush1.bf16.msra.mxu0 0
      %406 = vmatprep.subr.bf16.mxu0 0
      %407 = vmatpush1.bf16.msra.mxu0 0
      %408 = vmatprep.subr.bf16.mxu0 0
      %409 = vmatpush1.bf16.msra.mxu0 0
      %410 = vmatprep.subr.bf16.mxu0 0
      %411 = vmatpush1.bf16.msra.mxu0 0
      %412 = vmatprep.mubr.bf16.mxu0 0
      %413 = vmatmul.mubr.bf16.gmra.mrb[0].mxu0 %v365
      %v414 = vpop.f32.mrb[0].mxu0
      %v415 = vadd.f32 %v341, %v414
      %v416 = vpop.f32.mrb[0].mxu0
      %v417 = vpop.f32.mrb[0].mxu0
      %v418 = vadd.f32 %v341, %v417
      %v419 = vpop.f32.mrb[0].mxu0
      %420 = vmatprep.mubr.bf16.mxu0 0
      %421 = vmatmul.mubr.bf16.gmra.mrb[0].mxu0 %v368
      %v422 = vpop.f32.mrb[0].mxu0
      %v423 = vadd.f32 %v341, %v422
      %v424 = vpop.f32.mrb[0].mxu0
      %v425 = vpop.f32.mrb[0].mxu0
      %v426 = vadd.f32 %v341, %v425
      %v427 = vpop.f32.mrb[0].mxu0
      %428 = vmatprep.mubr.bf16.mxu0 0
      %429 = vmatmul.mubr.bf16.gmra.mrb[0].mxu0 %v371
      %v430 = vpop.f32.mrb[0].mxu0
      %v431 = vadd.f32 %v341, %v430
      %v432 = vpop.f32.mrb[0].mxu0
      %v433 = vpop.f32.mrb[0].mxu0
      %v434 = vadd.f32 %v341, %v433
      %v435 = vpop.f32.mrb[0].mxu0
      %436 = vmatprep.mubr.bf16.mxu0 0
      %437 = vmatmul.mubr.bf16.gmra.mrb[0].mxu0 %v374
      %v438 = vpop.f32.mrb[0].mxu0
      %v439 = vadd.f32 %v341, %v438
      %v440 = vpop.f32.mrb[0].mxu0
      %v441 = vpop.f32.mrb[0].mxu0
      %v442 = vadd.f32 %v341, %v441
      %v443 = vpop.f32.mrb[0].mxu0
      %444 = vdwg.mxu0
      %v445 = vtanh.pop %v415
      %v446 = vtanh.pop %v418
      %v447 = vtanh.pop %v423
      %v448 = vtanh.pop %v426
      %v449 = vtanh.pop %v431
      %v450 = vtanh.pop %v434
      %v451 = vtanh.pop %v439
      %v452 = vtanh.pop %v442
      %v453 = vld [vmem:[%s312] sm:$0xf]
      %v454 = vld [vmem:[%s312 + $0x4] sm:$0xf]
      %v455 = vld [vmem:[%s312 + $0x8] sm:$0xf]
      %v456 = vld [vmem:[%s312 + $0xc] sm:$0xf]
      %v457 = vld [vmem:[%s312 + $0x10] sm:$0xf]
      %v458 = vld [vmem:[%s312 + $0x14] sm:$0xf]
      %v459 = vld [vmem:[%s312 + $0x18] sm:$0xf]
      %v460 = vld [vmem:[%s312 + $0x1c] sm:$0xf]
      %v461 = vld [vmem:[%s5] sm:$0x3]
      %v462 = vld [vmem:[%s6] sm:$0x1]
      %v464 = vlaneseq
      %v465 = vshrl.u32 %v464, 7
      %v466 = vsub.s32 0, %v465
      %v467 = vrot.slane %v462, %v466
      %v477 = vunpack.c.l.b16 %v453
      %v478 = vunpack.c.l.b16 %v454
      %v479 = vunpack.c.l.b16 %v455
      %v480 = vunpack.c.l.b16 %v456
      %v481 = vunpack.c.l.b16 %v457
      %v482 = vunpack.c.l.b16 %v458
      %v483 = vunpack.c.l.b16 %v459
      %v484 = vunpack.c.l.b16 %v460
      %v485 = vpack.c.b16 %v478, %v477
      %v486 = vpack.c.b16 %v480, %v479
      %v487 = vpack.c.b16 %v482, %v481
      %v488 = vpack.c.b16 %v484, %v483
      %v490 = vsel %vm363, %v485, 0
      %v493 = vsel %vm363, %v486, 0
      %v496 = vsel %vm363, %v487, 0
      %v499 = vsel %vm363, %v488, 0
      %v502 = vsel %vm376, %v461, 0
      %504 = vmatprep.subr.bf16.mxu0 0
      %505 = vmatpush1.bf16.msra.mxu0 %v502
      %506 = vmatprep.subr.bf16.mxu0 0
      %507 = vmatpush1.bf16.msra.mxu0 0
      %508 = vmatprep.subr.bf16.mxu0 0
      %509 = vmatpush1.bf16.msra.mxu0 0
      %510 = vmatprep.subr.bf16.mxu0 0
      %511 = vmatpush1.bf16.msra.mxu0 0
      %512 = vmatprep.subr.bf16.mxu0 0
      %513 = vmatpush1.bf16.msra.mxu0 0
      %514 = vmatprep.subr.bf16.mxu0 0
      %515 = vmatpush1.bf16.msra.mxu0 0
      %516 = vmatprep.subr.bf16.mxu0 0
      %517 = vmatpush1.bf16.msra.mxu0 0
      %518 = vmatprep.subr.bf16.mxu0 0
      %519 = vmatpush1.bf16.msra.mxu0 0
      %520 = vmatprep.subr.bf16.mxu0 0
      %521 = vmatpush1.bf16.msra.mxu0 0
      %522 = vmatprep.subr.bf16.mxu0 0
      %523 = vmatpush1.bf16.msra.mxu0 0
      %524 = vmatprep.subr.bf16.mxu0 0
      %525 = vmatpush1.bf16.msra.mxu0 0
      %526 = vmatprep.subr.bf16.mxu0 0
      %527 = vmatpush1.bf16.msra.mxu0 0
      %528 = vmatprep.subr.bf16.mxu0 0
      %529 = vmatpush1.bf16.msra.mxu0 0
      %530 = vmatprep.subr.bf16.mxu0 0
      %531 = vmatpush1.bf16.msra.mxu0 0
      %532 = vmatprep.subr.bf16.mxu0 0
      %533 = vmatpush1.bf16.msra.mxu0 0
      %534 = vmatprep.subr.bf16.mxu0 0
      %535 = vmatpush1.bf16.msra.mxu0 0
      %536 = vmatprep.mubr.bf16.mxu0 0
      %537 = vmatmul.mubr.bf16.gmra.mrb[0].mxu0 %v490
      %v538 = vpop.f32.mrb[0].mxu0
      %v539 = vadd.f32 %v467, %v538
      %v540 = vpop.f32.mrb[0].mxu0
      %v541 = vpop.f32.mrb[0].mxu0
      %v542 = vadd.f32 %v467, %v541
      %v543 = vpop.f32.mrb[0].mxu0
      %544 = vmatprep.mubr.bf16.mxu0 0
      %545 = vmatmul.mubr.bf16.gmra.mrb[0].mxu0 %v493
      %v546 = vpop.f32.mrb[0].mxu0
      %v547 = vadd.f32 %v467, %v546
      %v548 = vpop.f32.mrb[0].mxu0
      %v549 = vpop.f32.mrb[0].mxu0
      %v550 = vadd.f32 %v467, %v549
      %v551 = vpop.f32.mrb[0].mxu0
      %552 = vmatprep.mubr.bf16.mxu0 0
      %553 = vmatmul.mubr.bf16.gmra.mrb[0].mxu0 %v496
      %v554 = vpop.f32.mrb[0].mxu0
      %v555 = vadd.f32 %v467, %v554
      %v556 = vpop.f32.mrb[0].mxu0
      %v557 = vpop.f32.mrb[0].mxu0
      %v558 = vadd.f32 %v467, %v557
      %v559 = vpop.f32.mrb[0].mxu0
      %560 = vmatprep.mubr.bf16.mxu0 0
      %561 = vmatmul.mubr.bf16.gmra.mrb[0].mxu0 %v499
      %v562 = vpop.f32.mrb[0].mxu0
      %v563 = vadd.f32 %v467, %v562
      %v564 = vpop.f32.mrb[0].mxu0
      %v565 = vpop.f32.mrb[0].mxu0
      %v566 = vadd.f32 %v467, %v565
      %v567 = vpop.f32.mrb[0].mxu0
      %568 = vdwg.mxu0
      %v569 = vtanh.pop %v539
      %v570 = vtanh.pop %v542
      %v571 = vtanh.pop %v547
      %v572 = vtanh.pop %v550
      %v573 = vtanh.pop %v555
      %v574 = vtanh.pop %v558
      %v575 = vtanh.pop %v563
      %v576 = vtanh.pop %v566
      %v577 = vld [vmem:[%s318] sm:$0xff]
      %v578 = vld [vmem:[%s318 + $0x8] sm:$0xff]
      %v579 = vld [vmem:[%s318 + $0x10] sm:$0xff]
      %v580 = vld [vmem:[%s318 + $0x18] sm:$0xff]
      %v581 = vld [vmem:[%s318 + $0x20] sm:$0xff]
      %v582 = vld [vmem:[%s318 + $0x28] sm:$0xff]
      %v583 = vld [vmem:[%s318 + $0x30] sm:$0xff]
      %v584 = vld [vmem:[%s318 + $0x38] sm:$0xff]
      %586 = vset.pattern.permute.xlu0 0
      %587 = vperm.xlu0 %586, %v577
      %v588 = vpop.permute.xlu0 %587
      %591 = vset.pattern.permute.xlu0 0
      %592 = vperm.xlu0 %591, %v578
      %v593 = vpop.permute.xlu0 %592
      %596 = vset.pattern.permute.xlu0 0
      %597 = vperm.xlu0 %596, %v579
      %v598 = vpop.permute.xlu0 %597
      %601 = vset.pattern.permute.xlu0 0
      %602 = vperm.xlu0 %601, %v580
      %v603 = vpop.permute.xlu0 %602
      %606 = vset.pattern.permute.xlu0 0
      %607 = vperm.xlu0 %606, %v581
      %v608 = vpop.permute.xlu0 %607
      %611 = vset.pattern.permute.xlu0 0
      %612 = vperm.xlu0 %611, %v582
      %v613 = vpop.permute.xlu0 %612
      %616 = vset.pattern.permute.xlu0 0
      %617 = vperm.xlu0 %616, %v583
      %v618 = vpop.permute.xlu0 %617
      %621 = vset.pattern.permute.xlu0 0
      %622 = vperm.xlu0 %621, %v584
      %v623 = vpop.permute.xlu0 %622
      %v625 = vmul.f32 %v445, %v588
      %v626 = vmul.f32 %v446, %v593
      %v627 = vmul.f32 %v447, %v598
      %v628 = vmul.f32 %v448, %v603
      %v629 = vmul.f32 %v449, %v608
      %v630 = vmul.f32 %v450, %v613
      %v631 = vmul.f32 %v451, %v618
      %v632 = vmul.f32 %v452, %v623
      %633 = vset.pattern.permute.xlu0 1
      %634 = vperm.xlu0 %633, %v577
      %v635 = vpop.permute.xlu0 %634
      %637 = vset.pattern.permute.xlu0 1
      %638 = vperm.xlu0 %637, %v578
      %v639 = vpop.permute.xlu0 %638
      %641 = vset.pattern.permute.xlu0 1
      %642 = vperm.xlu0 %641, %v579
      %v643 = vpop.permute.xlu0 %642
      %645 = vset.pattern.permute.xlu0 1
      %646 = vperm.xlu0 %645, %v580
      %v647 = vpop.permute.xlu0 %646
      %649 = vset.pattern.permute.xlu0 1
      %650 = vperm.xlu0 %649, %v581
      %v651 = vpop.permute.xlu0 %650
      %653 = vset.pattern.permute.xlu0 1
      %654 = vperm.xlu0 %653, %v582
      %v655 = vpop.permute.xlu0 %654
      %657 = vset.pattern.permute.xlu0 1
      %658 = vperm.xlu0 %657, %v583
      %v659 = vpop.permute.xlu0 %658
      %661 = vset.pattern.permute.xlu0 1
      %662 = vperm.xlu0 %661, %v584
      %v663 = vpop.permute.xlu0 %662
      %v665 = vmul.f32 %v445, %v635
      %v666 = vmul.f32 %v446, %v639
      %v667 = vmul.f32 %v447, %v643
      %v668 = vmul.f32 %v448, %v647
      %v669 = vmul.f32 %v449, %v651
      %v670 = vmul.f32 %v450, %v655
      %v671 = vmul.f32 %v451, %v659
      %v672 = vmul.f32 %v452, %v663
      %681 = vrot.lane.b32.xlu0 %v665, 124
      %v682 = vpop.permute.xlu0 %681
      %683 = vrot.lane.b32.xlu0 %v666, 124
      %v684 = vpop.permute.xlu0 %683
      %685 = vrot.lane.b32.xlu0 %v667, 124
      %v686 = vpop.permute.xlu0 %685
      %687 = vrot.lane.b32.xlu0 %v668, 124
      %v688 = vpop.permute.xlu0 %687
      %689 = vrot.lane.b32.xlu0 %v669, 124
      %v690 = vpop.permute.xlu0 %689
      %691 = vrot.lane.b32.xlu0 %v670, 124
      %v692 = vpop.permute.xlu0 %691
      %693 = vrot.lane.b32.xlu0 %v671, 124
      %v694 = vpop.permute.xlu0 %693
      %695 = vrot.lane.b32.xlu0 %v672, 124
      %v696 = vpop.permute.xlu0 %695
      %v705 = vadd.f32 %v625, %v682
      %v706 = vadd.f32 %v626, %v684
      %v707 = vadd.f32 %v627, %v686
      %v708 = vadd.f32 %v628, %v688
      %v709 = vadd.f32 %v629, %v690
      %v710 = vadd.f32 %v630, %v692
      %v711 = vadd.f32 %v631, %v694
      %v712 = vadd.f32 %v632, %v696
      %714 = vset.pattern.permute.xlu0 0
      %715 = vperm.xlu0 %714, %v705
      %v716 = vpop.permute.xlu0 %715
      %719 = vset.pattern.permute.xlu0 0
      %720 = vperm.xlu0 %719, %v706
      %v721 = vpop.permute.xlu0 %720
      %724 = vset.pattern.permute.xlu0 0
      %725 = vperm.xlu0 %724, %v707
      %v726 = vpop.permute.xlu0 %725
      %729 = vset.pattern.permute.xlu0 0
      %730 = vperm.xlu0 %729, %v708
      %v731 = vpop.permute.xlu0 %730
      %734 = vset.pattern.permute.xlu0 0
      %735 = vperm.xlu0 %734, %v709
      %v736 = vpop.permute.xlu0 %735
      %739 = vset.pattern.permute.xlu0 0
      %740 = vperm.xlu0 %739, %v710
      %v741 = vpop.permute.xlu0 %740
      %744 = vset.pattern.permute.xlu0 0
      %745 = vperm.xlu0 %744, %v711
      %v746 = vpop.permute.xlu0 %745
      %749 = vset.pattern.permute.xlu0 0
      %750 = vperm.xlu0 %749, %v712
      %v751 = vpop.permute.xlu0 %750
      %v753 = vmul.f32 %v569, %v716
      %v754 = vmul.f32 %v570, %v721
      %v755 = vmul.f32 %v571, %v726
      %v756 = vmul.f32 %v572, %v731
      %v757 = vmul.f32 %v573, %v736
      %v758 = vmul.f32 %v574, %v741
      %v759 = vmul.f32 %v575, %v746
      %v760 = vmul.f32 %v576, %v751
      %761 = vset.pattern.permute.xlu0 1
      %762 = vperm.xlu0 %761, %v705
      %v763 = vpop.permute.xlu0 %762
      %765 = vset.pattern.permute.xlu0 1
      %766 = vperm.xlu0 %765, %v706
      %v767 = vpop.permute.xlu0 %766
      %769 = vset.pattern.permute.xlu0 1
      %770 = vperm.xlu0 %769, %v707
      %v771 = vpop.permute.xlu0 %770
      %773 = vset.pattern.permute.xlu0 1
      %774 = vperm.xlu0 %773, %v708
      %v775 = vpop.permute.xlu0 %774
      %777 = vset.pattern.permute.xlu0 1
      %778 = vperm.xlu0 %777, %v709
      %v779 = vpop.permute.xlu0 %778
      %781 = vset.pattern.permute.xlu0 1
      %782 = vperm.xlu0 %781, %v710
      %v783 = vpop.permute.xlu0 %782
      %785 = vset.pattern.permute.xlu0 1
      %786 = vperm.xlu0 %785, %v711
      %v787 = vpop.permute.xlu0 %786
      %789 = vset.pattern.permute.xlu0 1
      %790 = vperm.xlu0 %789, %v712
      %v791 = vpop.permute.xlu0 %790
      %v793 = vmul.f32 %v569, %v763
      %v794 = vmul.f32 %v570, %v767
      %v795 = vmul.f32 %v571, %v771
      %v796 = vmul.f32 %v572, %v775
      %v797 = vmul.f32 %v573, %v779
      %v798 = vmul.f32 %v574, %v783
      %v799 = vmul.f32 %v575, %v787
      %v800 = vmul.f32 %v576, %v791
      %809 = vrot.lane.b32.xlu0 %v793, 124
      %v810 = vpop.permute.xlu0 %809
      %811 = vrot.lane.b32.xlu0 %v794, 124
      %v812 = vpop.permute.xlu0 %811
      %813 = vrot.lane.b32.xlu0 %v795, 124
      %v814 = vpop.permute.xlu0 %813
      %815 = vrot.lane.b32.xlu0 %v796, 124
      %v816 = vpop.permute.xlu0 %815
      %817 = vrot.lane.b32.xlu0 %v797, 124
      %v818 = vpop.permute.xlu0 %817
      %819 = vrot.lane.b32.xlu0 %v798, 124
      %v820 = vpop.permute.xlu0 %819
      %821 = vrot.lane.b32.xlu0 %v799, 124
      %v822 = vpop.permute.xlu0 %821
      %823 = vrot.lane.b32.xlu0 %v800, 124
      %v824 = vpop.permute.xlu0 %823
      %v833 = vadd.f32 %v753, %v810
      %v834 = vadd.f32 %v754, %v812
      %v835 = vadd.f32 %v755, %v814
      %v836 = vadd.f32 %v756, %v816
      %v837 = vadd.f32 %v757, %v818
      %v838 = vadd.f32 %v758, %v820
      %v839 = vadd.f32 %v759, %v822
      %v840 = vadd.f32 %v760, %v824
      %841 = vset.pattern.permute.xlu0 2
      %842 = vperm.xlu0 %841, %v705
      %v843 = vpop.permute.xlu0 %842
      %845 = vset.pattern.permute.xlu0 2
      %846 = vperm.xlu0 %845, %v706
      %v847 = vpop.permute.xlu0 %846
      %849 = vset.pattern.permute.xlu0 2
      %850 = vperm.xlu0 %849, %v707
      %v851 = vpop.permute.xlu0 %850
      %853 = vset.pattern.permute.xlu0 2
      %854 = vperm.xlu0 %853, %v708
      %v855 = vpop.permute.xlu0 %854
      %857 = vset.pattern.permute.xlu0 2
      %858 = vperm.xlu0 %857, %v709
      %v859 = vpop.permute.xlu0 %858
      %861 = vset.pattern.permute.xlu0 2
      %862 = vperm.xlu0 %861, %v710
      %v863 = vpop.permute.xlu0 %862
      %865 = vset.pattern.permute.xlu0 2
      %866 = vperm.xlu0 %865, %v711
      %v867 = vpop.permute.xlu0 %866
      %869 = vset.pattern.permute.xlu0 2
      %870 = vperm.xlu0 %869, %v712
      %v871 = vpop.permute.xlu0 %870
      %v873 = vmul.f32 %v569, %v843
      %v874 = vmul.f32 %v570, %v847
      %v875 = vmul.f32 %v571, %v851
      %v876 = vmul.f32 %v572, %v855
      %v877 = vmul.f32 %v573, %v859
      %v878 = vmul.f32 %v574, %v863
      %v879 = vmul.f32 %v575, %v867
      %v880 = vmul.f32 %v576, %v871
      %889 = vrot.lane.b32.xlu0 %v873, 120
      %v890 = vpop.permute.xlu0 %889
      %891 = vrot.lane.b32.xlu0 %v874, 120
      %v892 = vpop.permute.xlu0 %891
      %893 = vrot.lane.b32.xlu0 %v875, 120
      %v894 = vpop.permute.xlu0 %893
      %895 = vrot.lane.b32.xlu0 %v876, 120
      %v896 = vpop.permute.xlu0 %895
      %897 = vrot.lane.b32.xlu0 %v877, 120
      %v898 = vpop.permute.xlu0 %897
      %899 = vrot.lane.b32.xlu0 %v878, 120
      %v900 = vpop.permute.xlu0 %899
      %901 = vrot.lane.b32.xlu0 %v879, 120
      %v902 = vpop.permute.xlu0 %901
      %903 = vrot.lane.b32.xlu0 %v880, 120
      %v904 = vpop.permute.xlu0 %903
      %v913 = vadd.f32 %v833, %v890
      %v914 = vadd.f32 %v834, %v892
      %v915 = vadd.f32 %v835, %v894
      %v916 = vadd.f32 %v836, %v896
      %v917 = vadd.f32 %v837, %v898
      %v918 = vadd.f32 %v838, %v900
      %v919 = vadd.f32 %v839, %v902
      %v920 = vadd.f32 %v840, %v904
      %921 = vset.pattern.permute.xlu0 3
      %922 = vperm.xlu0 %921, %v705
      %v923 = vpop.permute.xlu0 %922
      %925 = vset.pattern.permute.xlu0 3
      %926 = vperm.xlu0 %925, %v706
      %v927 = vpop.permute.xlu0 %926
      %929 = vset.pattern.permute.xlu0 3
      %930 = vperm.xlu0 %929, %v707
      %v931 = vpop.permute.xlu0 %930
      %933 = vset.pattern.permute.xlu0 3
      %934 = vperm.xlu0 %933, %v708
      %v935 = vpop.permute.xlu0 %934
      %937 = vset.pattern.permute.xlu0 3
      %938 = vperm.xlu0 %937, %v709
      %v939 = vpop.permute.xlu0 %938
      %941 = vset.pattern.permute.xlu0 3
      %942 = vperm.xlu0 %941, %v710
      %v943 = vpop.permute.xlu0 %942
      %945 = vset.pattern.permute.xlu0 3
      %946 = vperm.xlu0 %945, %v711
      %v947 = vpop.permute.xlu0 %946
      %949 = vset.pattern.permute.xlu0 3
      %950 = vperm.xlu0 %949, %v712
      %v951 = vpop.permute.xlu0 %950
      %v953 = vmul.f32 %v569, %v923
      %v954 = vmul.f32 %v570, %v927
      %v955 = vmul.f32 %v571, %v931
      %v956 = vmul.f32 %v572, %v935
      %v957 = vmul.f32 %v573, %v939
      %v958 = vmul.f32 %v574, %v943
      %v959 = vmul.f32 %v575, %v947
      %v960 = vmul.f32 %v576, %v951
      %969 = vrot.lane.b32.xlu0 %v953, 116
      %v970 = vpop.permute.xlu0 %969
      %971 = vrot.lane.b32.xlu0 %v954, 116
      %v972 = vpop.permute.xlu0 %971
      %973 = vrot.lane.b32.xlu0 %v955, 116
      %v974 = vpop.permute.xlu0 %973
      %975 = vrot.lane.b32.xlu0 %v956, 116
      %v976 = vpop.permute.xlu0 %975
      %977 = vrot.lane.b32.xlu0 %v957, 116
      %v978 = vpop.permute.xlu0 %977
      %979 = vrot.lane.b32.xlu0 %v958, 116
      %v980 = vpop.permute.xlu0 %979
      %981 = vrot.lane.b32.xlu0 %v959, 116
      %v982 = vpop.permute.xlu0 %981
      %983 = vrot.lane.b32.xlu0 %v960, 116
      %v984 = vpop.permute.xlu0 %983
      %v993 = vadd.f32 %v913, %v970
      %v994 = vadd.f32 %v914, %v972
      %v995 = vadd.f32 %v915, %v974
      %v996 = vadd.f32 %v916, %v976
      %v997 = vadd.f32 %v917, %v978
      %v998 = vadd.f32 %v918, %v980
      %v999 = vadd.f32 %v919, %v982
      %v1000 = vadd.f32 %v920, %v984
      %1001 = vst.msk [vmem:[%s324] sm:$0xff] %vm363, %v705
      %1002 = vst.msk [vmem:[%s324 + $0x8] sm:$0xff] %vm363, %v706
      %1003 = vst.msk [vmem:[%s324 + $0x10] sm:$0xff] %vm363, %v707
      %1004 = vst.msk [vmem:[%s324 + $0x18] sm:$0xff] %vm363, %v708
      %1005 = vst.msk [vmem:[%s324 + $0x20] sm:$0xff] %vm363, %v709
      %1006 = vst.msk [vmem:[%s324 + $0x28] sm:$0xff] %vm363, %v710
      %1007 = vst.msk [vmem:[%s324 + $0x30] sm:$0xff] %vm363, %v711
      %1008 = vst.msk [vmem:[%s324 + $0x38] sm:$0xff] %vm363, %v712
      %1017 = vrot.lane.b32.xlu0 %v993, 4
      %v1018 = vpop.permute.xlu0 %1017
      %1019 = vrot.lane.b32.xlu0 %v994, 4
      %v1020 = vpop.permute.xlu0 %1019
      %1021 = vrot.lane.b32.xlu0 %v995, 4
      %v1022 = vpop.permute.xlu0 %1021
      %1023 = vrot.lane.b32.xlu0 %v996, 4
      %v1024 = vpop.permute.xlu0 %1023
      %1025 = vrot.lane.b32.xlu0 %v997, 4
      %v1026 = vpop.permute.xlu0 %1025
      %1027 = vrot.lane.b32.xlu0 %v998, 4
      %v1028 = vpop.permute.xlu0 %1027
      %1029 = vrot.lane.b32.xlu0 %v999, 4
      %v1030 = vpop.permute.xlu0 %1029
      %1031 = vrot.lane.b32.xlu0 %v1000, 4
      %v1032 = vpop.permute.xlu0 %1031
      %vm1041 = vcmask 64544
      %1042 = vst.msk [vmem:[%s324] sm:$0xff] %vm1041, %v1018
      %1043 = vst.msk [vmem:[%s324 + $0x8] sm:$0xff] %vm1041, %v1020
      %1044 = vst.msk [vmem:[%s324 + $0x10] sm:$0xff] %vm1041, %v1022
      %1045 = vst.msk [vmem:[%s324 + $0x18] sm:$0xff] %vm1041, %v1024
      %1046 = vst.msk [vmem:[%s324 + $0x20] sm:$0xff] %vm1041, %v1026
      %1047 = vst.msk [vmem:[%s324 + $0x28] sm:$0xff] %vm1041, %v1028
      %1048 = vst.msk [vmem:[%s324 + $0x30] sm:$0xff] %vm1041, %v1030
      %1049 = vst.msk [vmem:[%s324 + $0x38] sm:$0xff] %vm1041, %v1032
      %s1050 = smul.u32 8, %s18
      %p1051 = scmp.lt.s32.totalorder %s1050, 15
      %s1052 = scalar_select %p1051, %s1050, 15
      %s1053 = smul.addr %s1052, 8
      %s1054 = scalar_lea.vmem %s7, %s1053
      // Predicated region
      $region49: #{f_func_hz_cde_pallas.1} parent=47 // pred_check
        %p1055 = pneg %p198
      $region50: #{f_func_hz_cde_pallas.1} parent=47 // pred_check_branch
        %1057 = sbr.rel (%p1055) target = $region52
      $region51: #{f_func_hz_cde_pallas.1} parent=47 // pred_region
        %s1058 = smul.u32 8, %s18
      $region52: #{f_func_hz_cde_pallas.1} parent=47 // pred_fallthru
        _
    $region48: #{f_func_hz_cde_pallas.1} parent=5 // pred_fallthru
      _
    %p1059 = scmp.le.s32.totalorder 2, %s13
    // Predicated region
    $region53: #{f_func_hz_cde_pallas.1} parent=5 // pred_check
      %p1060 = pneg %p1059
    $region54: #{f_func_hz_cde_pallas.1} parent=5 // pred_check_branch
      %1062 = sbr.rel (%p1060) target = $region56
    $region55: #{f_func_hz_cde_pallas.1} parent=5 // pred_region
      %s1063 = ssub.s32 %s13, 2
      // Predicated region
      $region57: #{f_func_hz_cde_pallas.1} parent=55 // pred_check
        %p1064 = pneg %p204
      $region58: #{f_func_hz_cde_pallas.1} parent=55 // pred_check_branch
        %1066 = sbr.rel (%p1064) target = $region60
      $region59: #{f_func_hz_cde_pallas.1} parent=55 // pred_region
        %s1067 = smul.u32 8, %s19
        %p1068 = scmp.lt.s32.totalorder %s1067, 15
        %s1069 = scalar_select %p1068, %s1067, 15
        %s1070 = smul.addr %s1069, 8
        %s1071 = scalar_lea.vmem %s7, %s1070
      $region60: #{f_func_hz_cde_pallas.1} parent=55 // pred_fallthru
        _
    $region56: #{f_func_hz_cde_pallas.1} parent=5 // pred_fallthru
      _
  $region6: #{f_func_hz_cde_pallas.1} parent=0 // loop_footer
    %s17 = sadd.s32 1, %s13
  $region7: #{f_func_hz_cde_pallas.1} parent=0 // loop_footer_branch
    %12 = sbr.rel target = $region3
  $region8: #{f_func_hz_cde_pallas.1} parent=0 // loop_exit
    _

</llo_original>
